<compile_context>
chip_gen: v7x
topology: tpu7x:2x2x1
jax: 0.10.0
libtpu: 0.0.40
codegen_flags: <defaults>
</compile_context>

<pallas_src>
import jax
import jax.numpy as jnp
from jax.experimental import pallas as pl
from jax.experimental.pallas import tpu as pltpu

EPS = 1e-5


# ------------------------------ Pallas kernel ------------------------------ #
def _fused_stem_kernel(p_ref, w_ref, b_ref, o_ref, pad_ref):
    """Fused conv(as matmul) + BN bias + ReLU + 3x3/s2 maxpool for one image.

    p_ref:   (OH*OW, KPAD)      bf16 im2col patches of one batch image
    w_ref:   (KPAD, C)          bf16 conv weights with BN scale folded in
    b_ref:   (1, C)             f32 folded BN bias
    o_ref:   (1, POH, POW, C)   f32 pooled output (NHWC)
    pad_ref: (1, OH+2, OW+2, C) f32 VMEM scratch; zero border == pool padding
    """
    _, hp, wp, c = pad_ref.shape
    oh, ow = hp - 2, wp - 2
    _, poh, pw, _ = o_ref.shape

    # Conv as one MXU matmul (bf16 in, f32 accumulate) + fused BN bias + ReLU.
    acc = jnp.dot(p_ref[...], w_ref[...], preferred_element_type=jnp.float32)
    y = jnp.maximum(acc + b_ref[...], 0.0)                 # (OH*OW, C) f32

    # Scatter conv rows into the zero-padded scratch (interior at offset 1,1).
    pad_ref[...] = jnp.zeros_like(pad_ref)
    for r in range(oh):                                    # static, unrolled
        pad_ref[0, r + 1, 1:1 + ow, :] = y[r * ow:(r + 1) * ow, :]

    # 3x3 stride-2 max pool over the padded, VMEM-resident tile.
    best = pad_ref[:, pl.ds(0, poh, 2), pl.ds(0, pw, 2), :]
    for dh in range(3):
        for dw in range(3):
            if dh == 0 and dw == 0:
                continue
            best = jnp.maximum(
                best, pad_ref[:, pl.ds(dh, poh, 2), pl.ds(dw, pw, 2), :])
    o_ref[...] = best.astype(o_ref.dtype)


# --------------------------------- wrapper --------------------------------- #
@jax.jit
def client_resnet34x1_forward(x_nchw, conv_w, bn_gamma, bn_beta, bn_mean, bn_var):
    N, Cin, H, W = x_nchw.shape
    Cout, _, KH, KW = conv_w.shape
    stride, pad = 2, 3
    OH = (H + 2 * pad - KH) // stride + 1
    OW = (W + 2 * pad - KW) // stride + 1
    POH = (OH + 2 - 3) // 2 + 1
    POW = (OW + 2 - 3) // 2 + 1

    K = KH * KW * Cin
    KPAD = ((K + 127) // 128) * 128          # 147 -> 256: clean MXU/lane tiles

    # XLA glue (pure data rearrangement, fuses into one gather-style fusion):
    # NCHW -> NHWC, bf16 cast, spatial pad, im2col, K zero-pad.
    x = jnp.transpose(x_nchw, (0, 2, 3, 1)).astype(jnp.bfloat16)
    xp = jnp.pad(x, ((0, 0), (pad, pad), (pad, pad), (0, 0)))
    cols = []
    for dh in range(KH):
        for dw in range(KW):
            cols.append(
                xp[:, dh:dh + stride * OH:stride, dw:dw + stride * OW:stride, :])
    patches = jnp.concatenate(cols, axis=-1).reshape(N * OH * OW, K)
    patches = jnp.pad(patches, ((0, 0), (0, KPAD - K)))          # (M, KPAD) bf16

    # Fold BN (inference mode) into the weights (scale) and a bias vector.
    scale = bn_gamma / jnp.sqrt(bn_var + EPS)
    bias = bn_beta - bn_mean * scale
    w2d = jnp.transpose(conv_w, (2, 3, 1, 0)).reshape(K, Cout)   # (K, Cout)
    w2d = (w2d * scale[None, :]).astype(jnp.bfloat16)
    w2d = jnp.pad(w2d, ((0, KPAD - K), (0, 0)))                  # (KPAD, Cout)
    bias2d = bias.reshape(1, Cout).astype(jnp.float32)

    TM = OH * OW                                                 # rows / image

    pooled = pl.pallas_call(
        _fused_stem_kernel,
        out_shape=jax.ShapeDtypeStruct((N, POH, POW, Cout), jnp.float32),
        grid_spec=pltpu.PrefetchScalarGridSpec(
            num_scalar_prefetch=0,
            grid=(N,),
            in_specs=[
                pl.BlockSpec((TM, KPAD), lambda n: (n, 0)),
                pl.BlockSpec((KPAD, Cout), lambda n: (0, 0)),
                pl.BlockSpec((1, Cout), lambda n: (0, 0)),
            ],
            out_specs=pl.BlockSpec((1, POH, POW, Cout),
                                   lambda n: (n, 0, 0, 0)),
            scratch_shapes=[
                pltpu.VMEM((1, OH + 2, OW + 2, Cout), jnp.float32)],
        ),
        compiler_params=pltpu.CompilerParams(
            dimension_semantics=("parallel",)),
    )(patches, w2d, bias2d)

    return jnp.transpose(pooled, (0, 3, 1, 2))                   # NHWC -> NCHW


# ------------------------- pure-JAX reference (check) ----------------------- #
def _reference(x, w, gamma, beta, mean, var):
    y = jax.lax.conv_general_dilated(
        x, w, window_strides=(2, 2), padding=((3, 3), (3, 3)),
        dimension_numbers=("NCHW", "OIHW", "NCHW"),
        precision=jax.lax.Precision.HIGHEST)
    scale = gamma / jnp.sqrt(var + EPS)
    bias = beta - mean * scale
    y = y * scale[None, :, None, None] + bias[None, :, None, None]
    y = jnp.maximum(y, 0.0)
    yp = jnp.pad(y, ((0, 0), (0, 0), (1, 1), (1, 1)), constant_values=-jnp.inf)
    return jax.lax.reduce_window(yp, -jnp.inf, jax.lax.max,
                                 (1, 1, 3, 3), (1, 1, 2, 2), "VALID")


if __name__ == "__main__":
    key = jax.random.PRNGKey(0)
    k1, k2, k3, k4, k5, k6 = jax.random.split(key, 6)

    # Deterministic synthetic parameters (shapes from the module's __init__).
    conv_w = 0.05 * jax.random.normal(k1, (64, 3, 7, 7), jnp.float32)
    bn_gamma = 1.0 + 0.1 * jax.random.normal(k2, (64,), jnp.float32)
    bn_beta = 0.1 * jax.random.normal(k3, (64,), jnp.float32)
    bn_mean = 0.1 * jax.random.normal(k4, (64,), jnp.float32)
    bn_var = 1.0 + 0.1 * jnp.abs(jax.random.normal(k5, (64,), jnp.float32))

    # Small NCHW input: (batch=2, channels=3, 32x32) -> output (2, 64, 8, 8).
    x = jax.random.normal(k6, (2, 3, 32, 32), jnp.float32)

    out = client_resnet34x1_forward(x, conv_w, bn_gamma, bn_beta, bn_mean, bn_var)
    out = jax.block_until_ready(out)

    ref = _reference(x, conv_w, bn_gamma, bn_beta, bn_mean, bn_var)
    assert out.shape == ref.shape == (2, 64, 8, 8), out.shape
    assert jnp.allclose(out, ref, rtol=2e-2, atol=2e-2), float(
        jnp.max(jnp.abs(out - ref)))

    print("KERNEL_OK")
</pallas_src>

<mosaic_0001>
module attributes {stable_mosaic.version = 11 : i64} {
  func.func @_fused_stem_kernel(%arg0: i32, %arg1: memref<256x256xbf16, #tpu.memory_space<vmem>>, %arg2: memref<256x64xbf16, #tpu.memory_space<vmem>>, %arg3: memref<1x64xf32, #tpu.memory_space<vmem>>, %arg4: memref<1x8x8x64xf32, #tpu.memory_space<vmem>>, %arg5: memref<1x18x18x64xf32, #tpu.memory_space<vmem>>) attributes {dimension_semantics = [#tpu.dimension_semantics<parallel>], iteration_bounds = array<i64: 2>, scalar_prefetch = 0 : i64, scratch_operands = 1 : i64, tpu.core_type = #tpu.core_type<tc>, window_params = [{transform_indices = @transform_0, window_bounds = array<i64: 256, 256>}, {pipeline_mode = #tpu.pipeline_mode<synchronous>, transform_indices = @transform_1, window_bounds = array<i64: 256, 64>}, {pipeline_mode = #tpu.pipeline_mode<synchronous>, transform_indices = @transform_2, window_bounds = array<i64: 1, 64>}, {transform_indices = @transform_3, window_bounds = array<i64: 1, 8, 8, 64>}]} {
    %c0 = arith.constant 0 : index
    %c0_0 = arith.constant 0 : index
    %0 = vector.load %arg1[%c0, %c0_0] : memref<256x256xbf16, #tpu.memory_space<vmem>>, vector<256x256xbf16>
    %c0_1 = arith.constant 0 : index
    %c0_2 = arith.constant 0 : index
    %1 = vector.load %arg2[%c0_1, %c0_2] : memref<256x64xbf16, #tpu.memory_space<vmem>>, vector<256x64xbf16>
    %cst = arith.constant dense<0.000000e+00> : vector<256x64xf32>
    %2 = tpu.matmul %0, %1, %cst {dimension_numbers = #tpu.dot_dimension_numbers<[1], [0], [0], [1], [0, 0, 1, 1], [], []>} : vector<256x256xbf16>, vector<256x64xbf16>, vector<256x64xf32> -> vector<256x64xf32>
    %c0_3 = arith.constant 0 : index
    %c0_4 = arith.constant 0 : index
    %3 = vector.load %arg3[%c0_3, %c0_4] : memref<1x64xf32, #tpu.memory_space<vmem>>, vector<1x64xf32>
    %4 = vector.broadcast %3 : vector<1x64xf32> to vector<256x64xf32>
    %5 = arith.addf %2, %4 : vector<256x64xf32>
    %cst_5 = arith.constant 0.000000e+00 : f32
    %6 = vector.broadcast %cst_5 : f32 to vector<256x64xf32>
    %7 = arith.maximumf %5, %6 : vector<256x64xf32>
    %cst_6 = arith.constant 0.000000e+00 : f32
    %8 = vector.broadcast %cst_6 : f32 to vector<1x18x18x64xf32>
    %c0_7 = arith.constant 0 : index
    %c0_8 = arith.constant 0 : index
    %c0_9 = arith.constant 0 : index
    %c0_10 = arith.constant 0 : index
    %9 = vector.load %arg5[%c0_7, %c0_8, %c0_9, %c0_10] : memref<1x18x18x64xf32, #tpu.memory_space<vmem>>, vector<1x18x18x64xf32>
    tpu.vector_store %arg5[%c0_7, %c0_8, %c0_9, %c0_10], %8 {strides = array<i32>} : memref<1x18x18x64xf32, #tpu.memory_space<vmem>>, vector<1x18x18x64xf32>,
    %10 = vector.extract_strided_slice %7 {offsets = [0, 0], sizes = [16, 64], strides = [1, 1]} : vector<256x64xf32> to vector<16x64xf32>
    %c0_11 = arith.constant 0 : index
    %c1 = arith.constant 1 : index
    %c1_12 = arith.constant 1 : index
    %c0_13 = arith.constant 0 : index
    %11 = vector.load %arg5[%c0_11, %c1, %c1_12, %c0_13] : memref<1x18x18x64xf32, #tpu.memory_space<vmem>>, vector<1x1x16x64xf32>
    %12 = vector.shape_cast %11 : vector<1x1x16x64xf32> to vector<16x64xf32>
    %13 = vector.shape_cast %10 : vector<16x64xf32> to vector<1x1x16x64xf32>
    tpu.vector_store %arg5[%c0_11, %c1, %c1_12, %c0_13], %13 {strides = array<i32>} : memref<1x18x18x64xf32, #tpu.memory_space<vmem>>, vector<1x1x16x64xf32>,
    %14 = vector.extract_strided_slice %7 {offsets = [16, 0], sizes = [16, 64], strides = [1, 1]} : vector<256x64xf32> to vector<16x64xf32>
    %c0_14 = arith.constant 0 : index
    %c2 = arith.constant 2 : index
    %c1_15 = arith.constant 1 : index
    %c0_16 = arith.constant 0 : index
    %15 = vector.load %arg5[%c0_14, %c2, %c1_15, %c0_16] : memref<1x18x18x64xf32, #tpu.memory_space<vmem>>, vector<1x1x16x64xf32>
    %16 = vector.shape_cast %15 : vector<1x1x16x64xf32> to vector<16x64xf32>
    %17 = vector.shape_cast %14 : vector<16x64xf32> to vector<1x1x16x64xf32>
    tpu.vector_store %arg5[%c0_14, %c2, %c1_15, %c0_16], %17 {strides = array<i32>} : memref<1x18x18x64xf32, #tpu.memory_space<vmem>>, vector<1x1x16x64xf32>,
    %18 = vector.extract_strided_slice %7 {offsets = [32, 0], sizes = [16, 64], strides = [1, 1]} : vector<256x64xf32> to vector<16x64xf32>
    %c0_17 = arith.constant 0 : index
    %c3 = arith.constant 3 : index
    %c1_18 = arith.constant 1 : index
    %c0_19 = arith.constant 0 : index
    %19 = vector.load %arg5[%c0_17, %c3, %c1_18, %c0_19] : memref<1x18x18x64xf32, #tpu.memory_space<vmem>>, vector<1x1x16x64xf32>
    %20 = vector.shape_cast %19 : vector<1x1x16x64xf32> to vector<16x64xf32>
    %21 = vector.shape_cast %18 : vector<16x64xf32> to vector<1x1x16x64xf32>
    tpu.vector_store %arg5[%c0_17, %c3, %c1_18, %c0_19], %21 {strides = array<i32>} : memref<1x18x18x64xf32, #tpu.memory_space<vmem>>, vector<1x1x16x64xf32>,
    %22 = vector.extract_strided_slice %7 {offsets = [48, 0], sizes = [16, 64], strides = [1, 1]} : vector<256x64xf32> to vector<16x64xf32>
    %c0_20 = arith.constant 0 : index
    %c4 = arith.constant 4 : index
    %c1_21 = arith.constant 1 : index
    %c0_22 = arith.constant 0 : index
    %23 = vector.load %arg5[%c0_20, %c4, %c1_21, %c0_22] : memref<1x18x18x64xf32, #tpu.memory_space<vmem>>, vector<1x1x16x64xf32>
    %24 = vector.shape_cast %23 : vector<1x1x16x64xf32> to vector<16x64xf32>
    %25 = vector.shape_cast %22 : vector<16x64xf32> to vector<1x1x16x64xf32>
    tpu.vector_store %arg5[%c0_20, %c4, %c1_21, %c0_22], %25 {strides = array<i32>} : memref<1x18x18x64xf32, #tpu.memory_space<vmem>>, vector<1x1x16x64xf32>,
    %26 = vector.extract_strided_slice %7 {offsets = [64, 0], sizes = [16, 64], strides = [1, 1]} : vector<256x64xf32> to vector<16x64xf32>
    %c0_23 = arith.constant 0 : index
    %c5 = arith.constant 5 : index
    %c1_24 = arith.constant 1 : index
    %c0_25 = arith.constant 0 : index
    %27 = vector.load %arg5[%c0_23, %c5, %c1_24, %c0_25] : memref<1x18x18x64xf32, #tpu.memory_space<vmem>>, vector<1x1x16x64xf32>
    %28 = vector.shape_cast %27 : vector<1x1x16x64xf32> to vector<16x64xf32>
    %29 = vector.shape_cast %26 : vector<16x64xf32> to vector<1x1x16x64xf32>
    tpu.vector_store %arg5[%c0_23, %c5, %c1_24, %c0_25], %29 {strides = array<i32>} : memref<1x18x18x64xf32, #tpu.memory_space<vmem>>, vector<1x1x16x64xf32>,
    %30 = vector.extract_strided_slice %7 {offsets = [80, 0], sizes = [16, 64], strides = [1, 1]} : vector<256x64xf32> to vector<16x64xf32>
    %c0_26 = arith.constant 0 : index
    %c6 = arith.constant 6 : index
    %c1_27 = arith.constant 1 : index
    %c0_28 = arith.constant 0 : index
    %31 = vector.load %arg5[%c0_26, %c6, %c1_27, %c0_28] : memref<1x18x18x64xf32, #tpu.memory_space<vmem>>, vector<1x1x16x64xf32>
    %32 = vector.shape_cast %31 : vector<1x1x16x64xf32> to vector<16x64xf32>
    %33 = vector.shape_cast %30 : vector<16x64xf32> to vector<1x1x16x64xf32>
    tpu.vector_store %arg5[%c0_26, %c6, %c1_27, %c0_28], %33 {strides = array<i32>} : memref<1x18x18x64xf32, #tpu.memory_space<vmem>>, vector<1x1x16x64xf32>,
    %34 = vector.extract_strided_slice %7 {offsets = [96, 0], sizes = [16, 64], strides = [1, 1]} : vector<256x64xf32> to vector<16x64xf32>
    %c0_29 = arith.constant 0 : index
    %c7 = arith.constant 7 : index
    %c1_30 = arith.constant 1 : index
    %c0_31 = arith.constant 0 : index
    %35 = vector.load %arg5[%c0_29, %c7, %c1_30, %c0_31] : memref<1x18x18x64xf32, #tpu.memory_space<vmem>>, vector<1x1x16x64xf32>
    %36 = vector.shape_cast %35 : vector<1x1x16x64xf32> to vector<16x64xf32>
    %37 = vector.shape_cast %34 : vector<16x64xf32> to vector<1x1x16x64xf32>
    tpu.vector_store %arg5[%c0_29, %c7, %c1_30, %c0_31], %37 {strides = array<i32>} : memref<1x18x18x64xf32, #tpu.memory_space<vmem>>, vector<1x1x16x64xf32>,
    %38 = vector.extract_strided_slice %7 {offsets = [112, 0], sizes = [16, 64], strides = [1, 1]} : vector<256x64xf32> to vector<16x64xf32>
    %c0_32 = arith.constant 0 : index
    %c8 = arith.constant 8 : index
    %c1_33 = arith.constant 1 : index
    %c0_34 = arith.constant 0 : index
    %39 = vector.load %arg5[%c0_32, %c8, %c1_33, %c0_34] : memref<1x18x18x64xf32, #tpu.memory_space<vmem>>, vector<1x1x16x64xf32>
    %40 = vector.shape_cast %39 : vector<1x1x16x64xf32> to vector<16x64xf32>
    %41 = vector.shape_cast %38 : vector<16x64xf32> to vector<1x1x16x64xf32>
    tpu.vector_store %arg5[%c0_32, %c8, %c1_33, %c0_34], %41 {strides = array<i32>} : memref<1x18x18x64xf32, #tpu.memory_space<vmem>>, vector<1x1x16x64xf32>,
    %42 = vector.extract_strided_slice %7 {offsets = [128, 0], sizes = [16, 64], strides = [1, 1]} : vector<256x64xf32> to vector<16x64xf32>
    %c0_35 = arith.constant 0 : index
    %c9 = arith.constant 9 : index
    %c1_36 = arith.constant 1 : index
    %c0_37 = arith.constant 0 : index
    %43 = vector.load %arg5[%c0_35, %c9, %c1_36, %c0_37] : memref<1x18x18x64xf32, #tpu.memory_space<vmem>>, vector<1x1x16x64xf32>
    %44 = vector.shape_cast %43 : vector<1x1x16x64xf32> to vector<16x64xf32>
    %45 = vector.shape_cast %42 : vector<16x64xf32> to vector<1x1x16x64xf32>
    tpu.vector_store %arg5[%c0_35, %c9, %c1_36, %c0_37], %45 {strides = array<i32>} : memref<1x18x18x64xf32, #tpu.memory_space<vmem>>, vector<1x1x16x64xf32>,
    %46 = vector.extract_strided_slice %7 {offsets = [144, 0], sizes = [16, 64], strides = [1, 1]} : vector<256x64xf32> to vector<16x64xf32>
    %c0_38 = arith.constant 0 : index
    %c10 = arith.constant 10 : index
    %c1_39 = arith.constant 1 : index
    %c0_40 = arith.constant 0 : index
    %47 = vector.load %arg5[%c0_38, %c10, %c1_39, %c0_40] : memref<1x18x18x64xf32, #tpu.memory_space<vmem>>, vector<1x1x16x64xf32>
    %48 = vector.shape_cast %47 : vector<1x1x16x64xf32> to vector<16x64xf32>
    %49 = vector.shape_cast %46 : vector<16x64xf32> to vector<1x1x16x64xf32>
    tpu.vector_store %arg5[%c0_38, %c10, %c1_39, %c0_40], %49 {strides = array<i32>} : memref<1x18x18x64xf32, #tpu.memory_space<vmem>>, vector<1x1x16x64xf32>,
    %50 = vector.extract_strided_slice %7 {offsets = [160, 0], sizes = [16, 64], strides = [1, 1]} : vector<256x64xf32> to vector<16x64xf32>
    %c0_41 = arith.constant 0 : index
    %c11 = arith.constant 11 : index
    %c1_42 = arith.constant 1 : index
    %c0_43 = arith.constant 0 : index
    %51 = vector.load %arg5[%c0_41, %c11, %c1_42, %c0_43] : memref<1x18x18x64xf32, #tpu.memory_space<vmem>>, vector<1x1x16x64xf32>
    %52 = vector.shape_cast %51 : vector<1x1x16x64xf32> to vector<16x64xf32>
    %53 = vector.shape_cast %50 : vector<16x64xf32> to vector<1x1x16x64xf32>
    tpu.vector_store %arg5[%c0_41, %c11, %c1_42, %c0_43], %53 {strides = array<i32>} : memref<1x18x18x64xf32, #tpu.memory_space<vmem>>, vector<1x1x16x64xf32>,
    %54 = vector.extract_strided_slice %7 {offsets = [176, 0], sizes = [16, 64], strides = [1, 1]} : vector<256x64xf32> to vector<16x64xf32>
    %c0_44 = arith.constant 0 : index
    %c12 = arith.constant 12 : index
    %c1_45 = arith.constant 1 : index
    %c0_46 = arith.constant 0 : index
    %55 = vector.load %arg5[%c0_44, %c12, %c1_45, %c0_46] : memref<1x18x18x64xf32, #tpu.memory_space<vmem>>, vector<1x1x16x64xf32>
    %56 = vector.shape_cast %55 : vector<1x1x16x64xf32> to vector<16x64xf32>
    %57 = vector.shape_cast %54 : vector<16x64xf32> to vector<1x1x16x64xf32>
    tpu.vector_store %arg5[%c0_44, %c12, %c1_45, %c0_46], %57 {strides = array<i32>} : memref<1x18x18x64xf32, #tpu.memory_space<vmem>>, vector<1x1x16x64xf32>,
    %58 = vector.extract_strided_slice %7 {offsets = [192, 0], sizes = [16, 64], strides = [1, 1]} : vector<256x64xf32> to vector<16x64xf32>
    %c0_47 = arith.constant 0 : index
    %c13 = arith.constant 13 : index
    %c1_48 = arith.constant 1 : index
    %c0_49 = arith.constant 0 : index
    %59 = vector.load %arg5[%c0_47, %c13, %c1_48, %c0_49] : memref<1x18x18x64xf32, #tpu.memory_space<vmem>>, vector<1x1x16x64xf32>
    %60 = vector.shape_cast %59 : vector<1x1x16x64xf32> to vector<16x64xf32>
    %61 = vector.shape_cast %58 : vector<16x64xf32> to vector<1x1x16x64xf32>
    tpu.vector_store %arg5[%c0_47, %c13, %c1_48, %c0_49], %61 {strides = array<i32>} : memref<1x18x18x64xf32, #tpu.memory_space<vmem>>, vector<1x1x16x64xf32>,
    %62 = vector.extract_strided_slice %7 {offsets = [208, 0], sizes = [16, 64], strides = [1, 1]} : vector<256x64xf32> to vector<16x64xf32>
    %c0_50 = arith.constant 0 : index
    %c14 = arith.constant 14 : index
    %c1_51 = arith.constant 1 : index
    %c0_52 = arith.constant 0 : index
    %63 = vector.load %arg5[%c0_50, %c14, %c1_51, %c0_52] : memref<1x18x18x64xf32, #tpu.memory_space<vmem>>, vector<1x1x16x64xf32>
    %64 = vector.shape_cast %63 : vector<1x1x16x64xf32> to vector<16x64xf32>
    %65 = vector.shape_cast %62 : vector<16x64xf32> to vector<1x1x16x64xf32>
    tpu.vector_store %arg5[%c0_50, %c14, %c1_51, %c0_52], %65 {strides = array<i32>} : memref<1x18x18x64xf32, #tpu.memory_space<vmem>>, vector<1x1x16x64xf32>,
    %66 = vector.extract_strided_slice %7 {offsets = [224, 0], sizes = [16, 64], strides = [1, 1]} : vector<256x64xf32> to vector<16x64xf32>
    %c0_53 = arith.constant 0 : index
    %c15 = arith.constant 15 : index
    %c1_54 = arith.constant 1 : index
    %c0_55 = arith.constant 0 : index
    %67 = vector.load %arg5[%c0_53, %c15, %c1_54, %c0_55] : memref<1x18x18x64xf32, #tpu.memory_space<vmem>>, vector<1x1x16x64xf32>
    %68 = vector.shape_cast %67 : vector<1x1x16x64xf32> to vector<16x64xf32>
    %69 = vector.shape_cast %66 : vector<16x64xf32> to vector<1x1x16x64xf32>
    tpu.vector_store %arg5[%c0_53, %c15, %c1_54, %c0_55], %69 {strides = array<i32>} : memref<1x18x18x64xf32, #tpu.memory_space<vmem>>, vector<1x1x16x64xf32>,
    %70 = vector.extract_strided_slice %7 {offsets = [240, 0], sizes = [16, 64], strides = [1, 1]} : vector<256x64xf32> to vector<16x64xf32>
    %c0_56 = arith.constant 0 : index
    %c16 = arith.constant 16 : index
    %c1_57 = arith.constant 1 : index
    %c0_58 = arith.constant 0 : index
    %71 = vector.load %arg5[%c0_56, %c16, %c1_57, %c0_58] : memref<1x18x18x64xf32, #tpu.memory_space<vmem>>, vector<1x1x16x64xf32>
    %72 = vector.shape_cast %71 : vector<1x1x16x64xf32> to vector<16x64xf32>
    %73 = vector.shape_cast %70 : vector<16x64xf32> to vector<1x1x16x64xf32>
    tpu.vector_store %arg5[%c0_56, %c16, %c1_57, %c0_58], %73 {strides = array<i32>} : memref<1x18x18x64xf32, #tpu.memory_space<vmem>>, vector<1x1x16x64xf32>,
    %c0_59 = arith.constant 0 : index
    %c0_60 = arith.constant 0 : index
    %c0_61 = arith.constant 0 : index
    %c0_62 = arith.constant 0 : index
    %74 = tpu.strided_load %arg5[%c0_59, %c0_60, %c0_61, %c0_62] {strides = array<i32: 1, 2, 2, 1>} : memref<1x18x18x64xf32, #tpu.memory_space<vmem>>, vector<1x8x8x64xf32>
    %c0_63 = arith.constant 0 : index
    %c0_64 = arith.constant 0 : index
    %c1_65 = arith.constant 1 : index
    %c0_66 = arith.constant 0 : index
    %75 = tpu.strided_load %arg5[%c0_63, %c0_64, %c1_65, %c0_66] {strides = array<i32: 1, 2, 2, 1>} : memref<1x18x18x64xf32, #tpu.memory_space<vmem>>, vector<1x8x8x64xf32>
    %76 = arith.maximumf %74, %75 : vector<1x8x8x64xf32>
    %c0_67 = arith.constant 0 : index
    %c0_68 = arith.constant 0 : index
    %c2_69 = arith.constant 2 : index
    %c0_70 = arith.constant 0 : index
    %77 = tpu.strided_load %arg5[%c0_67, %c0_68, %c2_69, %c0_70] {strides = array<i32: 1, 2, 2, 1>} : memref<1x18x18x64xf32, #tpu.memory_space<vmem>>, vector<1x8x8x64xf32>
    %78 = arith.maximumf %76, %77 : vector<1x8x8x64xf32>
    %c0_71 = arith.constant 0 : index
    %c1_72 = arith.constant 1 : index
    %c0_73 = arith.constant 0 : index
    %c0_74 = arith.constant 0 : index
    %79 = tpu.strided_load %arg5[%c0_71, %c1_72, %c0_73, %c0_74] {strides = array<i32: 1, 2, 2, 1>} : memref<1x18x18x64xf32, #tpu.memory_space<vmem>>, vector<1x8x8x64xf32>
    %80 = arith.maximumf %78, %79 : vector<1x8x8x64xf32>
    %c0_75 = arith.constant 0 : index
    %c1_76 = arith.constant 1 : index
    %c1_77 = arith.constant 1 : index
    %c0_78 = arith.constant 0 : index
    %81 = tpu.strided_load %arg5[%c0_75, %c1_76, %c1_77, %c0_78] {strides = array<i32: 1, 2, 2, 1>} : memref<1x18x18x64xf32, #tpu.memory_space<vmem>>, vector<1x8x8x64xf32>
    %82 = arith.maximumf %80, %81 : vector<1x8x8x64xf32>
    %c0_79 = arith.constant 0 : index
    %c1_80 = arith.constant 1 : index
    %c2_81 = arith.constant 2 : index
    %c0_82 = arith.constant 0 : index
    %83 = tpu.strided_load %arg5[%c0_79, %c1_80, %c2_81, %c0_82] {strides = array<i32: 1, 2, 2, 1>} : memref<1x18x18x64xf32, #tpu.memory_space<vmem>>, vector<1x8x8x64xf32>
    %84 = arith.maximumf %82, %83 : vector<1x8x8x64xf32>
    %c0_83 = arith.constant 0 : index
    %c2_84 = arith.constant 2 : index
    %c0_85 = arith.constant 0 : index
    %c0_86 = arith.constant 0 : index
    %85 = tpu.strided_load %arg5[%c0_83, %c2_84, %c0_85, %c0_86] {strides = array<i32: 1, 2, 2, 1>} : memref<1x18x18x64xf32, #tpu.memory_space<vmem>>, vector<1x8x8x64xf32>
    %86 = arith.maximumf %84, %85 : vector<1x8x8x64xf32>
    %c0_87 = arith.constant 0 : index
    %c2_88 = arith.constant 2 : index
    %c1_89 = arith.constant 1 : index
    %c0_90 = arith.constant 0 : index
    %87 = tpu.strided_load %arg5[%c0_87, %c2_88, %c1_89, %c0_90] {strides = array<i32: 1, 2, 2, 1>} : memref<1x18x18x64xf32, #tpu.memory_space<vmem>>, vector<1x8x8x64xf32>
    %88 = arith.maximumf %86, %87 : vector<1x8x8x64xf32>
    %c0_91 = arith.constant 0 : index
    %c2_92 = arith.constant 2 : index
    %c2_93 = arith.constant 2 : index
    %c0_94 = arith.constant 0 : index
    %89 = tpu.strided_load %arg5[%c0_91, %c2_92, %c2_93, %c0_94] {strides = array<i32: 1, 2, 2, 1>} : memref<1x18x18x64xf32, #tpu.memory_space<vmem>>, vector<1x8x8x64xf32>
    %90 = arith.maximumf %88, %89 : vector<1x8x8x64xf32>
    %c0_95 = arith.constant 0 : index
    %c0_96 = arith.constant 0 : index
    %c0_97 = arith.constant 0 : index
    %c0_98 = arith.constant 0 : index
    %91 = vector.load %arg4[%c0_95, %c0_96, %c0_97, %c0_98] : memref<1x8x8x64xf32, #tpu.memory_space<vmem>>, vector<1x8x8x64xf32>
    tpu.vector_store %arg4[%c0_95, %c0_96, %c0_97, %c0_98], %90 {strides = array<i32>} : memref<1x8x8x64xf32, #tpu.memory_space<vmem>>, vector<1x8x8x64xf32>,
    return
  }
  func.func @transform_0(%arg0: i32) -> (i32, i32) {
    %c0_i32 = arith.constant 0 : i32
    %c0_i32_0 = arith.constant 0 : i32
    return %arg0, %c0_i32 : i32, i32
  }
  func.func @transform_1(%arg0: i32) -> (i32, i32) {
    %c0_i32 = arith.constant 0 : i32
    %c0_i32_0 = arith.constant 0 : i32
    %c0_i32_1 = arith.constant 0 : i32
    return %c0_i32, %c0_i32_0 : i32, i32
  }
  func.func @transform_2(%arg0: i32) -> (i32, i32) {
    %c0_i32 = arith.constant 0 : i32
    %c0_i32_0 = arith.constant 0 : i32
    %c0_i32_1 = arith.constant 0 : i32
    return %c0_i32, %c0_i32_0 : i32, i32
  }
  func.func @transform_3(%arg0: i32) -> (i32, i32, i32, i32) {
    %c0_i32 = arith.constant 0 : i32
    %c0_i32_0 = arith.constant 0 : i32
    %c0_i32_1 = arith.constant 0 : i32
    %c0_i32_2 = arith.constant 0 : i32
    return %arg0, %c0_i32, %c0_i32_0, %c0_i32_1 : i32, i32, i32, i32
  }
}

</mosaic_0001>

<llo_original>
// kernel: client_resnet34x1_forward.1
$region0: #{client_resnet34x1_forward.1}
  #allocation0 [shape = 'u32[]', space=smem, size = 0x4, offset = 0x4, fixed_abs, tag = 'smem constant byte address 0x4 - core index']
  #allocation1 [shape = 'u32[144,128]{1,0:T(1,128)}', space=vmem, size = 0x12000, scoped, tag = 'internal scratch']
  #allocation2 [shape = 'f32[1,18,18,64]{3,2,1,0:T(8,128)}', space=vmem, size = 0x36000, scoped, tag = 'scratch operand']
  %s0 = inlined_call_operand.vmem [shape: bf16[512,256], index: 0, kind: input, shape index: {}]
  %s1 = inlined_call_operand.vmem [shape: bf16[256,64], index: 1, kind: input, shape index: {}]
  %s2 = inlined_call_operand.vmem [shape: f32[1,64], index: 2, kind: input, shape index: {}]
  %s3 = inlined_call_operand.hbm [shape: f32[2,8,8,64], index: 3, kind: output, shape index: {}]
  %s4 = sld [smem:[#allocation0]]
  $region45: #{client_resnet34x1_forward.1} parent=0
    _
  %s6 = ssub.s32 1, %s4
  %s7 = scalar_select 0, %s6, %s4
  $region1: #{client_resnet34x1_forward.1} parent=0
    #allocation3 [shape = 'u8[65536]{0}', space=vmem, size = 0x10000, scoped, tag = 'output window, operand 0']
    #allocation4 [shape = 's32[2]{0}', space=sflag, size = 0x8, scoped, tag = 'scoped memory for client_resnet34x1_forward.1']
    %8 = vsyncpa [#allocation4], 0
    %s9 = scalar_lea.sflag [#allocation4], 1
    %10 = vsyncpa %s9, 0
    loop: start=0, step=1, limit=4
    $region2: #{client_resnet34x1_forward.1} parent=1 // loop_pre_header
      _
    $region3: #{client_resnet34x1_forward.1} parent=1 // loop_header
      %s12 = sphi 0, %s16
      %p13 = scmp.ge.s32.totalorder %s12, 4
      %s22 = sphi 0, %s24
      %s25 = sphi 0, %s22
      %s26 = sphi 0, %s25
      %s42 = sphi 0, %s26
      %s46 = sphi 0, %s46
      %s48 = sphi 0, %s46
      %s49 = sphi 0, %s48
      %s63 = sphi 0, %s49
      %s67 = sphi 0, %s67
      %s69 = sphi 0, %s67
      %s70 = sphi 0, %s69
      %s84 = sphi 0, %s70
      %s90 = sphi 0, %s92
      %s93 = sphi 0, %s90
      %s94 = sphi 0, %s93
      %s110 = sphi 0, %s94
    $region4: #{client_resnet34x1_forward.1} parent=1 // loop_header_branch
      %15 = sbr.rel (%p13) target = $region8
    $region5: #{client_resnet34x1_forward.1} parent=1 // loop_body
      %s17 = ssub.s32 %s12, 1
      %s18 = ssub.s32 %s12, 2
      %s19 = sadd.s32 %s12, 1
      %s20 = ssub.s32 %s12, %s19
      %p21 = scmp.eq.s32.totalorder %s20, 0
      %s23 = sadd.s32 %s22, 1
      %s24 = scalar_select %p21, %s22, %s23
      %p27 = pneg %p21
      %p28 = scmp.eq.s32.totalorder %s12, 1
      %p29 = por %p27, %p28
      %p30 = scmp.ne.s32.totalorder %s22, %s25
      %p31 = scmp.eq.s32.totalorder %s12, 0
      %p32 = por %p30, %p31
      %p33 = scmp.ne.s32.totalorder %s22, %s25
      %p34 = scmp.eq.s32.totalorder %s17, 1
      %p35 = por %p33, %p34
      %p36 = scmp.ne.s32.totalorder %s25, %s26
      %p37 = scmp.eq.s32.totalorder %s17, 0
      %p38 = por %p36, %p37
      %p39 = scmp.ne.s32.totalorder %s25, %s26
      %p40 = scmp.eq.s32.totalorder %s18, 1
      %p41 = por %p39, %p40
      %p43 = scmp.ne.s32.totalorder %s26, %s42
      %p44 = scmp.eq.s32.totalorder %s18, 0
      %p45 = por %p43, %p44
      %s47 = sadd.s32 %s46, 1
      %p50 = scmp.eq.s32.totalorder %s12, 1
      %p51 = scmp.ne.s32.totalorder %s46, %s48
      %p52 = scmp.eq.s32.totalorder %s12, 0
      %p53 = por %p51, %p52
      %p54 = scmp.ne.s32.totalorder %s46, %s48
      %p55 = scmp.eq.s32.totalorder %s17, 1
      %p56 = por %p54, %p55
      %p57 = scmp.ne.s32.totalorder %s48, %s49
      %p58 = scmp.eq.s32.totalorder %s17, 0
      %p59 = por %p57, %p58
      %p60 = scmp.ne.s32.totalorder %s48, %s49
      %p61 = scmp.eq.s32.totalorder %s18, 1
      %p62 = por %p60, %p61
      %p64 = scmp.ne.s32.totalorder %s49, %s63
      %p65 = scmp.eq.s32.totalorder %s18, 0
      %p66 = por %p64, %p65
      %s68 = sadd.s32 %s67, 1
      %p71 = scmp.eq.s32.totalorder %s12, 1
      %p72 = scmp.ne.s32.totalorder %s67, %s69
      %p73 = scmp.eq.s32.totalorder %s12, 0
      %p74 = por %p72, %p73
      %p75 = scmp.ne.s32.totalorder %s67, %s69
      %p76 = scmp.eq.s32.totalorder %s17, 1
      %p77 = por %p75, %p76
      %p78 = scmp.ne.s32.totalorder %s69, %s70
      %p79 = scmp.eq.s32.totalorder %s17, 0
      %p80 = por %p78, %p79
      %p81 = scmp.ne.s32.totalorder %s69, %s70
      %p82 = scmp.eq.s32.totalorder %s18, 1
      %p83 = por %p81, %p82
      %p85 = scmp.ne.s32.totalorder %s70, %s84
      %p86 = scmp.eq.s32.totalorder %s18, 0
      %p87 = por %p85, %p86
      %s88 = ssub.s32 %s12, %s19
      %p89 = scmp.eq.s32.totalorder %s88, 0
      %s91 = sadd.s32 %s90, 1
      %s92 = scalar_select %p89, %s90, %s91
      %p95 = pneg %p89
      %p96 = scmp.eq.s32.totalorder %s12, 1
      %p97 = por %p95, %p96
      %p98 = scmp.ne.s32.totalorder %s90, %s93
      %p99 = scmp.eq.s32.totalorder %s12, 0
      %p100 = por %p98, %p99
      %p101 = scmp.ne.s32.totalorder %s90, %s93
      %p102 = scmp.eq.s32.totalorder %s17, 1
      %p103 = por %p101, %p102
      %p104 = scmp.ne.s32.totalorder %s93, %s94
      %p105 = scmp.eq.s32.totalorder %s17, 0
      %p106 = por %p104, %p105
      %p107 = scmp.ne.s32.totalorder %s93, %s94
      %p108 = scmp.eq.s32.totalorder %s18, 1
      %p109 = por %p107, %p108
      %p111 = scmp.ne.s32.totalorder %s94, %s110
      %p112 = scmp.eq.s32.totalorder %s18, 0
      %p113 = por %p111, %p112
      %p114 = scmp.le.s32.totalorder 1, %s12
      %p115 = scmp.lt.s32.totalorder %s12, 3
      %p116 = pnand %p114, %p115
      %p117 = pneg %p116
      // Predicated region
      $region9: #{client_resnet34x1_forward.1} parent=5 // pred_check
        _
      $region10: #{client_resnet34x1_forward.1} parent=5 // pred_check_branch
        %119 = sbr.rel (%p116) target = $region12
      $region11: #{client_resnet34x1_forward.1} parent=5 // pred_region
        %s120 = ssub.s32 %s12, 1
        // Predicated region
        $region13: #{client_resnet34x1_forward.1} parent=11 // pred_check
          %p121 = pneg %p59
        $region14: #{client_resnet34x1_forward.1} parent=11 // pred_check_branch
          %123 = sbr.rel (%p121) target = $region16
        $region15: #{client_resnet34x1_forward.1} parent=11 // pred_region
          _
        $region16: #{client_resnet34x1_forward.1} parent=11 // pred_fallthru
          _
        // Predicated region
        $region17: #{client_resnet34x1_forward.1} parent=11 // pred_check
          %p124 = pneg %p80
        $region18: #{client_resnet34x1_forward.1} parent=11 // pred_check_branch
          %126 = sbr.rel (%p124) target = $region20
        $region19: #{client_resnet34x1_forward.1} parent=11 // pred_region
          _
        $region20: #{client_resnet34x1_forward.1} parent=11 // pred_fallthru
          _
      $region12: #{client_resnet34x1_forward.1} parent=5 // pred_fallthru
        _
      %p127 = scmp.lt.s32.totalorder %s12, 2
      // Predicated region
      $region21: #{client_resnet34x1_forward.1} parent=5 // pred_check
        %p128 = pneg %p127
      $region22: #{client_resnet34x1_forward.1} parent=5 // pred_check_branch
        %130 = sbr.rel (%p128) target = $region24
      $region23: #{client_resnet34x1_forward.1} parent=5 // pred_region
        // Predicated region
        $region25: #{client_resnet34x1_forward.1} parent=23 // pred_check
          %p131 = pneg %p32
        $region26: #{client_resnet34x1_forward.1} parent=23 // pred_check_branch
          %133 = sbr.rel (%p131) target = $region28
        $region27: #{client_resnet34x1_forward.1} parent=23 // pred_region
          %s134 = smul.u32 32, %s12
          %p135 = scmp.lt.s32.totalorder %s134, 63
          %s136 = scalar_select %p135, %s134, 63
          %s137 = smul.addr %s136, 2
          %s138 = smul.addr %s137, 4
          %s139 = scalar_lea.vmem %s0, %s138
          %s140 = smul.u32 32, %s12
        $region28: #{client_resnet34x1_forward.1} parent=23 // pred_fallthru
          _
      $region24: #{client_resnet34x1_forward.1} parent=5 // pred_fallthru
        _
      %p141 = scmp.le.s32.totalorder 1, %s12
      %p142 = scmp.lt.s32.totalorder %s12, 3
      %p143 = pnand %p141, %p142
      %p144 = pneg %p143
      // Predicated region
      $region29: #{client_resnet34x1_forward.1} parent=5 // pred_check
        _
      $region30: #{client_resnet34x1_forward.1} parent=5 // pred_check_branch
        %146 = sbr.rel (%p143) target = $region32
      $region31: #{client_resnet34x1_forward.1} parent=5 // pred_region
        %s147 = ssub.s32 %s12, 1
        %s148 = smul.u32 32, %s17
        %p149 = scmp.lt.s32.totalorder %s148, 63
        %s150 = scalar_select %p149, %s148, 63
        %s151 = smul.addr %s150, 2
        %s152 = smul.addr %s151, 4
        %s153 = scalar_lea.vmem %s0, %s152
        %p154 = pneg %p38
        %p155 = pneg %p35
        %p156 = pneg %p59
        %p157 = pneg %p56
        %p158 = pneg %p80
        %p159 = pneg %p77
        %p160 = pneg %p106
        %p161 = pneg %p103
        %s162 = sand.u32 %s93, 1
        %s163 = scalar_lea.sflag [#allocation4], %s162
        %s164 = sand.u32 %s93, 1
        %s165 = smul.addr %s164, 64
        %s166 = scalar_lea.vmem [#allocation3], %s165
        %s167 = smul.u32 32, %s17
        %p168 = scmp.lt.s32.totalorder %s167, 63
        %s169 = scalar_select %p168, %s167, 63
        %s170 = smul.addr %s169, 2
        %s171 = smul.addr %s170, 4
        %s172 = scalar_lea.vmem %s0, %s171
        %s173 = smul.u32 32, %s17
        %v175 = vld [vmem:[%s172] sm:$0xff]
        %v176 = vld [vmem:[%s172 + $0x8] sm:$0xff]
        %v177 = vld [vmem:[%s172 + $0x10] sm:$0xff]
        %v178 = vld [vmem:[%s172 + $0x18] sm:$0xff]
        %v179 = vld [vmem:[%s172 + $0x20] sm:$0xff]
        %v180 = vld [vmem:[%s172 + $0x28] sm:$0xff]
        %v181 = vld [vmem:[%s172 + $0x30] sm:$0xff]
        %v182 = vld [vmem:[%s172 + $0x38] sm:$0xff]
        %v183 = vld [vmem:[%s172 + $0x40] sm:$0xff]
        %v184 = vld [vmem:[%s172 + $0x48] sm:$0xff]
        %v185 = vld [vmem:[%s172 + $0x50] sm:$0xff]
        %v186 = vld [vmem:[%s172 + $0x58] sm:$0xff]
        %v187 = vld [vmem:[%s172 + $0x60] sm:$0xff]
        %v188 = vld [vmem:[%s172 + $0x68] sm:$0xff]
        %v189 = vld [vmem:[%s172 + $0x70] sm:$0xff]
        %v190 = vld [vmem:[%s172 + $0x78] sm:$0xff]
        %v191 = vld [vmem:[%s172 + $0x80] sm:$0xff]
        %v192 = vld [vmem:[%s172 + $0x88] sm:$0xff]
        %v193 = vld [vmem:[%s172 + $0x90] sm:$0xff]
        %v194 = vld [vmem:[%s172 + $0x98] sm:$0xff]
        %v195 = vld [vmem:[%s172 + $0xa0] sm:$0xff]
        %v196 = vld [vmem:[%s172 + $0xa8] sm:$0xff]
        %v197 = vld [vmem:[%s172 + $0xb0] sm:$0xff]
        %v198 = vld [vmem:[%s172 + $0xb8] sm:$0xff]
        %v199 = vld [vmem:[%s172 + $0xc0] sm:$0xff]
        %v200 = vld [vmem:[%s172 + $0xc8] sm:$0xff]
        %v201 = vld [vmem:[%s172 + $0xd0] sm:$0xff]
        %v202 = vld [vmem:[%s172 + $0xd8] sm:$0xff]
        %v203 = vld [vmem:[%s172 + $0xe0] sm:$0xff]
        %v204 = vld [vmem:[%s172 + $0xe8] sm:$0xff]
        %v205 = vld [vmem:[%s172 + $0xf0] sm:$0xff]
        %v206 = vld [vmem:[%s172 + $0xf8] sm:$0xff]
        %v207 = vld [vmem:[%s1] sm:$0xf]
        %v208 = vld [vmem:[%s1 + $0x4] sm:$0xf]
        %v209 = vld [vmem:[%s1 + $0x8] sm:$0xf]
        %v210 = vld [vmem:[%s1 + $0xc] sm:$0xf]
        %v211 = vld [vmem:[%s1 + $0x10] sm:$0xf]
        %v212 = vld [vmem:[%s1 + $0x14] sm:$0xf]
        %v213 = vld [vmem:[%s1 + $0x18] sm:$0xf]
        %v214 = vld [vmem:[%s1 + $0x1c] sm:$0xf]
        %v215 = vld [vmem:[%s1 + $0x20] sm:$0xf]
        %v216 = vld [vmem:[%s1 + $0x24] sm:$0xf]
        %v217 = vld [vmem:[%s1 + $0x28] sm:$0xf]
        %v218 = vld [vmem:[%s1 + $0x2c] sm:$0xf]
        %v219 = vld [vmem:[%s1 + $0x30] sm:$0xf]
        %v220 = vld [vmem:[%s1 + $0x34] sm:$0xf]
        %v221 = vld [vmem:[%s1 + $0x38] sm:$0xf]
        %v222 = vld [vmem:[%s1 + $0x3c] sm:$0xf]
        %v223 = vld [vmem:[%s1 + $0x40] sm:$0xf]
        %v224 = vld [vmem:[%s1 + $0x44] sm:$0xf]
        %v225 = vld [vmem:[%s1 + $0x48] sm:$0xf]
        %v226 = vld [vmem:[%s1 + $0x4c] sm:$0xf]
        %v227 = vld [vmem:[%s1 + $0x50] sm:$0xf]
        %v228 = vld [vmem:[%s1 + $0x54] sm:$0xf]
        %v229 = vld [vmem:[%s1 + $0x58] sm:$0xf]
        %v230 = vld [vmem:[%s1 + $0x5c] sm:$0xf]
        %v231 = vld [vmem:[%s1 + $0x60] sm:$0xf]
        %v232 = vld [vmem:[%s1 + $0x64] sm:$0xf]
        %v233 = vld [vmem:[%s1 + $0x68] sm:$0xf]
        %v234 = vld [vmem:[%s1 + $0x6c] sm:$0xf]
        %v235 = vld [vmem:[%s1 + $0x70] sm:$0xf]
        %v236 = vld [vmem:[%s1 + $0x74] sm:$0xf]
        %v237 = vld [vmem:[%s1 + $0x78] sm:$0xf]
        %v238 = vld [vmem:[%s1 + $0x7c] sm:$0xf]
        %v239 = vld [vmem:[%s2] sm:$0x1]
        %v241 = vlaneseq
        %v242 = vshrl.u32 %v241, 7
        %v243 = vsub.s32 0, %v242
        %v244 = vrot.slane %v239, %v243
        %v278 = vunpack.c.l.b16 %v175
        %v279 = vunpack.c.h.b16 %v175
        %v280 = vunpack.c.l.b16 %v176
        %v281 = vunpack.c.h.b16 %v176
        %v282 = vunpack.c.l.b16 %v177
        %v283 = vunpack.c.h.b16 %v177
        %v284 = vunpack.c.l.b16 %v178
        %v285 = vunpack.c.h.b16 %v178
        %v286 = vunpack.c.l.b16 %v179
        %v287 = vunpack.c.h.b16 %v179
        %v288 = vunpack.c.l.b16 %v180
        %v289 = vunpack.c.h.b16 %v180
        %v290 = vunpack.c.l.b16 %v181
        %v291 = vunpack.c.h.b16 %v181
        %v292 = vunpack.c.l.b16 %v182
        %v293 = vunpack.c.h.b16 %v182
        %v294 = vunpack.c.l.b16 %v183
        %v295 = vunpack.c.h.b16 %v183
        %v296 = vunpack.c.l.b16 %v184
        %v297 = vunpack.c.h.b16 %v184
        %v298 = vunpack.c.l.b16 %v185
        %v299 = vunpack.c.h.b16 %v185
        %v300 = vunpack.c.l.b16 %v186
        %v301 = vunpack.c.h.b16 %v186
        %v302 = vunpack.c.l.b16 %v187
        %v303 = vunpack.c.h.b16 %v187
        %v304 = vunpack.c.l.b16 %v188
        %v305 = vunpack.c.h.b16 %v188
        %v306 = vunpack.c.l.b16 %v189
        %v307 = vunpack.c.h.b16 %v189
        %v308 = vunpack.c.l.b16 %v190
        %v309 = vunpack.c.h.b16 %v190
        %v310 = vunpack.c.l.b16 %v191
        %v311 = vunpack.c.h.b16 %v191
        %v312 = vunpack.c.l.b16 %v192
        %v313 = vunpack.c.h.b16 %v192
        %v314 = vunpack.c.l.b16 %v193
        %v315 = vunpack.c.h.b16 %v193
        %v316 = vunpack.c.l.b16 %v194
        %v317 = vunpack.c.h.b16 %v194
        %v318 = vunpack.c.l.b16 %v195
        %v319 = vunpack.c.h.b16 %v195
        %v320 = vunpack.c.l.b16 %v196
        %v321 = vunpack.c.h.b16 %v196
        %v322 = vunpack.c.l.b16 %v197
        %v323 = vunpack.c.h.b16 %v197
        %v324 = vunpack.c.l.b16 %v198
        %v325 = vunpack.c.h.b16 %v198
        %v326 = vunpack.c.l.b16 %v199
        %v327 = vunpack.c.h.b16 %v199
        %v328 = vunpack.c.l.b16 %v200
        %v329 = vunpack.c.h.b16 %v200
        %v330 = vunpack.c.l.b16 %v201
        %v331 = vunpack.c.h.b16 %v201
        %v332 = vunpack.c.l.b16 %v202
        %v333 = vunpack.c.h.b16 %v202
        %v334 = vunpack.c.l.b16 %v203
        %v335 = vunpack.c.h.b16 %v203
        %v336 = vunpack.c.l.b16 %v204
        %v337 = vunpack.c.h.b16 %v204
        %v338 = vunpack.c.l.b16 %v205
        %v339 = vunpack.c.h.b16 %v205
        %v340 = vunpack.c.l.b16 %v206
        %v341 = vunpack.c.h.b16 %v206
        %v342 = vpack.c.b16 %v280, %v278
        %v343 = vpack.c.b16 %v281, %v279
        %v344 = vpack.c.b16 %v284, %v282
        %v345 = vpack.c.b16 %v285, %v283
        %v346 = vpack.c.b16 %v288, %v286
        %v347 = vpack.c.b16 %v289, %v287
        %v348 = vpack.c.b16 %v292, %v290
        %v349 = vpack.c.b16 %v293, %v291
        %v350 = vpack.c.b16 %v296, %v294
        %v351 = vpack.c.b16 %v297, %v295
        %v352 = vpack.c.b16 %v300, %v298
        %v353 = vpack.c.b16 %v301, %v299
        %v354 = vpack.c.b16 %v304, %v302
        %v355 = vpack.c.b16 %v305, %v303
        %v356 = vpack.c.b16 %v308, %v306
        %v357 = vpack.c.b16 %v309, %v307
        %v358 = vpack.c.b16 %v312, %v310
        %v359 = vpack.c.b16 %v313, %v311
        %v360 = vpack.c.b16 %v316, %v314
        %v361 = vpack.c.b16 %v317, %v315
        %v362 = vpack.c.b16 %v320, %v318
        %v363 = vpack.c.b16 %v321, %v319
        %v364 = vpack.c.b16 %v324, %v322
        %v365 = vpack.c.b16 %v325, %v323
        %v366 = vpack.c.b16 %v328, %v326
        %v367 = vpack.c.b16 %v329, %v327
        %v368 = vpack.c.b16 %v332, %v330
        %v369 = vpack.c.b16 %v333, %v331
        %v370 = vpack.c.b16 %v336, %v334
        %v371 = vpack.c.b16 %v337, %v335
        %v372 = vpack.c.b16 %v340, %v338
        %v373 = vpack.c.b16 %v341, %v339
        %v438 = vunpack.c.l.b16 %v207
        %v439 = vunpack.c.l.b16 %v208
        %v440 = vunpack.c.l.b16 %v209
        %v441 = vunpack.c.l.b16 %v210
        %v442 = vunpack.c.l.b16 %v211
        %v443 = vunpack.c.l.b16 %v212
        %v444 = vunpack.c.l.b16 %v213
        %v445 = vunpack.c.l.b16 %v214
        %v446 = vunpack.c.l.b16 %v215
        %v447 = vunpack.c.l.b16 %v216
        %v448 = vunpack.c.l.b16 %v217
        %v449 = vunpack.c.l.b16 %v218
        %v450 = vunpack.c.l.b16 %v219
        %v451 = vunpack.c.l.b16 %v220
        %v452 = vunpack.c.l.b16 %v221
        %v453 = vunpack.c.l.b16 %v222
        %v454 = vunpack.c.l.b16 %v223
        %v455 = vunpack.c.l.b16 %v224
        %v456 = vunpack.c.l.b16 %v225
        %v457 = vunpack.c.l.b16 %v226
        %v458 = vunpack.c.l.b16 %v227
        %v459 = vunpack.c.l.b16 %v228
        %v460 = vunpack.c.l.b16 %v229
        %v461 = vunpack.c.l.b16 %v230
        %v462 = vunpack.c.l.b16 %v231
        %v463 = vunpack.c.l.b16 %v232
        %v464 = vunpack.c.l.b16 %v233
        %v465 = vunpack.c.l.b16 %v234
        %v466 = vunpack.c.l.b16 %v235
        %v467 = vunpack.c.l.b16 %v236
        %v468 = vunpack.c.l.b16 %v237
        %v469 = vunpack.c.l.b16 %v238
        %v470 = vpack.c.b16 %v439, %v438
        %v471 = vpack.c.b16 %v441, %v440
        %v472 = vpack.c.b16 %v443, %v442
        %v473 = vpack.c.b16 %v445, %v444
        %v474 = vpack.c.b16 %v447, %v446
        %v475 = vpack.c.b16 %v449, %v448
        %v476 = vpack.c.b16 %v451, %v450
        %v477 = vpack.c.b16 %v453, %v452
        %v478 = vpack.c.b16 %v455, %v454
        %v479 = vpack.c.b16 %v457, %v456
        %v480 = vpack.c.b16 %v459, %v458
        %v481 = vpack.c.b16 %v461, %v460
        %v482 = vpack.c.b16 %v463, %v462
        %v483 = vpack.c.b16 %v465, %v464
        %v484 = vpack.c.b16 %v467, %v466
        %v485 = vpack.c.b16 %v469, %v468
        %502 = vmatprep.subr.bf16.mxu0 0
        %503 = vmatpush1.bf16.msra.mxu0 %v470
        %504 = vmatprep.subr.bf16.mxu0 0
        %505 = vmatpush1.bf16.msra.mxu0 %v471
        %506 = vmatprep.subr.bf16.mxu0 0
        %507 = vmatpush1.bf16.msra.mxu0 %v472
        %508 = vmatprep.subr.bf16.mxu0 0
        %509 = vmatpush1.bf16.msra.mxu0 %v473
        %510 = vmatprep.subr.bf16.mxu0 0
        %511 = vmatpush1.bf16.msra.mxu0 %v474
        %512 = vmatprep.subr.bf16.mxu0 0
        %513 = vmatpush1.bf16.msra.mxu0 %v475
        %514 = vmatprep.subr.bf16.mxu0 0
        %515 = vmatpush1.bf16.msra.mxu0 %v476
        %516 = vmatprep.subr.bf16.mxu0 0
        %517 = vmatpush1.bf16.msra.mxu0 %v477
        %518 = vmatprep.subr.bf16.mxu0 0
        %519 = vmatpush1.bf16.msra.mxu0 %v478
        %520 = vmatprep.subr.bf16.mxu0 0
        %521 = vmatpush1.bf16.msra.mxu0 %v479
        %522 = vmatprep.subr.bf16.mxu0 0
        %523 = vmatpush1.bf16.msra.mxu0 %v480
        %524 = vmatprep.subr.bf16.mxu0 0
        %525 = vmatpush1.bf16.msra.mxu0 %v481
        %526 = vmatprep.subr.bf16.mxu0 0
        %527 = vmatpush1.bf16.msra.mxu0 %v482
        %528 = vmatprep.subr.bf16.mxu0 0
        %529 = vmatpush1.bf16.msra.mxu0 %v483
        %530 = vmatprep.subr.bf16.mxu0 0
        %531 = vmatpush1.bf16.msra.mxu0 %v484
        %532 = vmatprep.subr.bf16.mxu0 0
        %533 = vmatpush1.bf16.msra.mxu0 %v485
        %534 = vmatprep.mubr.bf16.mxu0 %v343
        %535 = vmatmul.mubr.bf16.gmra.mrb[0].mxu0 %v342
        %v536 = vpop.f32.mrb[0].mxu0
        %v537 = vadd.f32 %v244, %v536
        %v538 = vpop.f32.mrb[0].mxu0
        %v539 = vpop.f32.mrb[0].mxu0
        %v540 = vadd.f32 %v244, %v539
        %v541 = vpop.f32.mrb[0].mxu0
        %542 = vmatprep.mubr.bf16.mxu0 %v345
        %543 = vmatmul.mubr.bf16.gmra.mrb[0].mxu0 %v344
        %v544 = vpop.f32.mrb[0].mxu0
        %v545 = vadd.f32 %v244, %v544
        %v546 = vpop.f32.mrb[0].mxu0
        %v547 = vpop.f32.mrb[0].mxu0
        %v548 = vadd.f32 %v244, %v547
        %v549 = vpop.f32.mrb[0].mxu0
        %550 = vmatprep.mubr.bf16.mxu0 %v347
        %551 = vmatmul.mubr.bf16.gmra.mrb[0].mxu0 %v346
        %v552 = vpop.f32.mrb[0].mxu0
        %v553 = vadd.f32 %v244, %v552
        %v554 = vpop.f32.mrb[0].mxu0
        %v555 = vpop.f32.mrb[0].mxu0
        %v556 = vadd.f32 %v244, %v555
        %v557 = vpop.f32.mrb[0].mxu0
        %558 = vmatprep.mubr.bf16.mxu0 %v349
        %559 = vmatmul.mubr.bf16.gmra.mrb[0].mxu0 %v348
        %v560 = vpop.f32.mrb[0].mxu0
        %v561 = vadd.f32 %v244, %v560
        %v562 = vpop.f32.mrb[0].mxu0
        %v563 = vpop.f32.mrb[0].mxu0
        %v564 = vadd.f32 %v244, %v563
        %v565 = vpop.f32.mrb[0].mxu0
        %566 = vmatprep.mubr.bf16.mxu0 %v351
        %567 = vmatmul.mubr.bf16.gmra.mrb[0].mxu0 %v350
        %v568 = vpop.f32.mrb[0].mxu0
        %v569 = vadd.f32 %v244, %v568
        %v570 = vpop.f32.mrb[0].mxu0
        %v571 = vpop.f32.mrb[0].mxu0
        %v572 = vadd.f32 %v244, %v571
        %v573 = vpop.f32.mrb[0].mxu0
        %574 = vmatprep.mubr.bf16.mxu0 %v353
        %575 = vmatmul.mubr.bf16.gmra.mrb[0].mxu0 %v352
        %v576 = vpop.f32.mrb[0].mxu0
        %v577 = vadd.f32 %v244, %v576
        %v578 = vpop.f32.mrb[0].mxu0
        %v579 = vpop.f32.mrb[0].mxu0
        %v580 = vadd.f32 %v244, %v579
        %v581 = vpop.f32.mrb[0].mxu0
        %582 = vmatprep.mubr.bf16.mxu0 %v355
        %583 = vmatmul.mubr.bf16.gmra.mrb[0].mxu0 %v354
        %v584 = vpop.f32.mrb[0].mxu0
        %v585 = vadd.f32 %v244, %v584
        %v586 = vpop.f32.mrb[0].mxu0
        %v587 = vpop.f32.mrb[0].mxu0
        %v588 = vadd.f32 %v244, %v587
        %v589 = vpop.f32.mrb[0].mxu0
        %590 = vmatprep.mubr.bf16.mxu0 %v357
        %591 = vmatmul.mubr.bf16.gmra.mrb[0].mxu0 %v356
        %v592 = vpop.f32.mrb[0].mxu0
        %v593 = vadd.f32 %v244, %v592
        %v594 = vpop.f32.mrb[0].mxu0
        %v595 = vpop.f32.mrb[0].mxu0
        %v596 = vadd.f32 %v244, %v595
        %v597 = vpop.f32.mrb[0].mxu0
        %598 = vmatprep.mubr.bf16.mxu0 %v359
        %599 = vmatmul.mubr.bf16.gmra.mrb[0].mxu0 %v358
        %v600 = vpop.f32.mrb[0].mxu0
        %v601 = vadd.f32 %v244, %v600
        %v602 = vpop.f32.mrb[0].mxu0
        %v603 = vpop.f32.mrb[0].mxu0
        %v604 = vadd.f32 %v244, %v603
        %v605 = vpop.f32.mrb[0].mxu0
        %606 = vmatprep.mubr.bf16.mxu0 %v361
        %607 = vmatmul.mubr.bf16.gmra.mrb[0].mxu0 %v360
        %v608 = vpop.f32.mrb[0].mxu0
        %v609 = vadd.f32 %v244, %v608
        %v610 = vpop.f32.mrb[0].mxu0
        %v611 = vpop.f32.mrb[0].mxu0
        %v612 = vadd.f32 %v244, %v611
        %v613 = vpop.f32.mrb[0].mxu0
        %614 = vmatprep.mubr.bf16.mxu0 %v363
        %615 = vmatmul.mubr.bf16.gmra.mrb[0].mxu0 %v362
        %v616 = vpop.f32.mrb[0].mxu0
        %v617 = vadd.f32 %v244, %v616
        %v618 = vpop.f32.mrb[0].mxu0
        %v619 = vpop.f32.mrb[0].mxu0
        %v620 = vadd.f32 %v244, %v619
        %v621 = vpop.f32.mrb[0].mxu0
        %622 = vmatprep.mubr.bf16.mxu0 %v365
        %623 = vmatmul.mubr.bf16.gmra.mrb[0].mxu0 %v364
        %v624 = vpop.f32.mrb[0].mxu0
        %v625 = vadd.f32 %v244, %v624
        %v626 = vpop.f32.mrb[0].mxu0
        %v627 = vpop.f32.mrb[0].mxu0
        %v628 = vadd.f32 %v244, %v627
        %v629 = vpop.f32.mrb[0].mxu0
        %630 = vmatprep.mubr.bf16.mxu0 %v367
        %631 = vmatmul.mubr.bf16.gmra.mrb[0].mxu0 %v366
        %v632 = vpop.f32.mrb[0].mxu0
        %v633 = vadd.f32 %v244, %v632
        %v634 = vpop.f32.mrb[0].mxu0
        %v635 = vpop.f32.mrb[0].mxu0
        %v636 = vadd.f32 %v244, %v635
        %v637 = vpop.f32.mrb[0].mxu0
        %638 = vmatprep.mubr.bf16.mxu0 %v369
        %639 = vmatmul.mubr.bf16.gmra.mrb[0].mxu0 %v368
        %v640 = vpop.f32.mrb[0].mxu0
        %v641 = vadd.f32 %v244, %v640
        %v642 = vpop.f32.mrb[0].mxu0
        %v643 = vpop.f32.mrb[0].mxu0
        %v644 = vadd.f32 %v244, %v643
        %v645 = vpop.f32.mrb[0].mxu0
        %646 = vmatprep.mubr.bf16.mxu0 %v371
        %647 = vmatmul.mubr.bf16.gmra.mrb[0].mxu0 %v370
        %v648 = vpop.f32.mrb[0].mxu0
        %v649 = vadd.f32 %v244, %v648
        %v650 = vpop.f32.mrb[0].mxu0
        %v651 = vpop.f32.mrb[0].mxu0
        %v652 = vadd.f32 %v244, %v651
        %v653 = vpop.f32.mrb[0].mxu0
        %654 = vmatprep.mubr.bf16.mxu0 %v373
        %655 = vmatmul.mubr.bf16.gmra.mrb[0].mxu0 %v372
        %v656 = vpop.f32.mrb[0].mxu0
        %v657 = vadd.f32 %v244, %v656
        %v658 = vpop.f32.mrb[0].mxu0
        %v659 = vpop.f32.mrb[0].mxu0
        %v660 = vadd.f32 %v244, %v659
        %v661 = vpop.f32.mrb[0].mxu0
        %662 = vdwg.mxu0
        %v663 = vmax.f32 %v537, 0.0
        %v664 = vmax.f32 %v540, 0.0
        %v665 = vmax.f32 %v545, 0.0
        %v666 = vmax.f32 %v548, 0.0
        %v667 = vmax.f32 %v553, 0.0
        %v668 = vmax.f32 %v556, 0.0
        %v669 = vmax.f32 %v561, 0.0
        %v670 = vmax.f32 %v564, 0.0
        %v671 = vmax.f32 %v569, 0.0
        %v672 = vmax.f32 %v572, 0.0
        %v673 = vmax.f32 %v577, 0.0
        %v674 = vmax.f32 %v580, 0.0
        %v675 = vmax.f32 %v585, 0.0
        %v676 = vmax.f32 %v588, 0.0
        %v677 = vmax.f32 %v593, 0.0
        %v678 = vmax.f32 %v596, 0.0
        %v679 = vmax.f32 %v601, 0.0
        %v680 = vmax.f32 %v604, 0.0
        %v681 = vmax.f32 %v609, 0.0
        %v682 = vmax.f32 %v612, 0.0
        %v683 = vmax.f32 %v617, 0.0
        %v684 = vmax.f32 %v620, 0.0
        %v685 = vmax.f32 %v625, 0.0
        %v686 = vmax.f32 %v628, 0.0
        %v687 = vmax.f32 %v633, 0.0
        %v688 = vmax.f32 %v636, 0.0
        %v689 = vmax.f32 %v641, 0.0
        %v690 = vmax.f32 %v644, 0.0
        %v691 = vmax.f32 %v649, 0.0
        %v692 = vmax.f32 %v652, 0.0
        %v693 = vmax.f32 %v657, 0.0
        %v694 = vmax.f32 %v660, 0.0
        %vm695 = vcmask 523264
        %696 = vst.msk [vmem:[#allocation2] sm:$0xff] %vm695, 0.0
        %697 = vst.msk [vmem:[#allocation2 + $0x8] sm:$0xff] %vm695, 0.0
        %vm698 = vcmask 517120
        %699 = vst.msk [vmem:[#allocation2 + $0x10] sm:$0x3] %vm698, 0.0
        %700 = vst.msk [vmem:[#allocation2 + $0x18] sm:$0xff] %vm695, 0.0
        %701 = vst.msk [vmem:[#allocation2 + $0x20] sm:$0xff] %vm695, 0.0
        %702 = vst.msk [vmem:[#allocation2 + $0x28] sm:$0x3] %vm698, 0.0
        %703 = vst.msk [vmem:[#allocation2 + $0x30] sm:$0xff] %vm695, 0.0
        %704 = vst.msk [vmem:[#allocation2 + $0x38] sm:$0xff] %vm695, 0.0
        %705 = vst.msk [vmem:[#allocation2 + $0x40] sm:$0x3] %vm698, 0.0
        %706 = vst.msk [vmem:[#allocation2 + $0x48] sm:$0xff] %vm695, 0.0
        %707 = vst.msk [vmem:[#allocation2 + $0x50] sm:$0xff] %vm695, 0.0
        %708 = vst.msk [vmem:[#allocation2 + $0x58] sm:$0x3] %vm698, 0.0
        %709 = vst.msk [vmem:[#allocation2 + $0x60] sm:$0xff] %vm695, 0.0
        %710 = vst.msk [vmem:[#allocation2 + $0x68] sm:$0xff] %vm695, 0.0
        %711 = vst.msk [vmem:[#allocation2 + $0x70] sm:$0x3] %vm698, 0.0
        %712 = vst.msk [vmem:[#allocation2 + $0x78] sm:$0xff] %vm695, 0.0
        %713 = vst.msk [vmem:[#allocation2 + $0x80] sm:$0xff] %vm695, 0.0
        %714 = vst.msk [vmem:[#allocation2 + $0x88] sm:$0x3] %vm698, 0.0
        %715 = vst.msk [vmem:[#allocation2 + $0x90] sm:$0xff] %vm695, 0.0
        %716 = vst.msk [vmem:[#allocation2 + $0x98] sm:$0xff] %vm695, 0.0
        %717 = vst.msk [vmem:[#allocation2 + $0xa0] sm:$0x3] %vm698, 0.0
        %718 = vst.msk [vmem:[#allocation2 + $0xa8] sm:$0xff] %vm695, 0.0
        %719 = vst.msk [vmem:[#allocation2 + $0xb0] sm:$0xff] %vm695, 0.0
        %720 = vst.msk [vmem:[#allocation2 + $0xb8] sm:$0x3] %vm698, 0.0
        %721 = vst.msk [vmem:[#allocation2 + $0xc0] sm:$0xff] %vm695, 0.0
        %722 = vst.msk [vmem:[#allocation2 + $0xc8] sm:$0xff] %vm695, 0.0
        %723 = vst.msk [vmem:[#allocation2 + $0xd0] sm:$0x3] %vm698, 0.0
        %724 = vst.msk [vmem:[#allocation2 + $0xd8] sm:$0xff] %vm695, 0.0
        %725 = vst.msk [vmem:[#allocation2 + $0xe0] sm:$0xff] %vm695, 0.0
        %726 = vst.msk [vmem:[#allocation2 + $0xe8] sm:$0x3] %vm698, 0.0
        %727 = vst.msk [vmem:[#allocation2 + $0xf0] sm:$0xff] %vm695, 0.0
        %728 = vst.msk [vmem:[#allocation2 + $0xf8] sm:$0xff] %vm695, 0.0
        %729 = vst.msk [vmem:[#allocation2 + $0x100] sm:$0x3] %vm698, 0.0
        %730 = vst.msk [vmem:[#allocation2 + $0x108] sm:$0xff] %vm695, 0.0
        %731 = vst.msk [vmem:[#allocation2 + $0x110] sm:$0xff] %vm695, 0.0
        %732 = vst.msk [vmem:[#allocation2 + $0x118] sm:$0x3] %vm698, 0.0
        %733 = vst.msk [vmem:[#allocation2 + $0x120] sm:$0xff] %vm695, 0.0
        %734 = vst.msk [vmem:[#allocation2 + $0x128] sm:$0xff] %vm695, 0.0
        %735 = vst.msk [vmem:[#allocation2 + $0x130] sm:$0x3] %vm698, 0.0
        %736 = vst.msk [vmem:[#allocation2 + $0x138] sm:$0xff] %vm695, 0.0
        %737 = vst.msk [vmem:[#allocation2 + $0x140] sm:$0xff] %vm695, 0.0
        %738 = vst.msk [vmem:[#allocation2 + $0x148] sm:$0x3] %vm698, 0.0
        %739 = vst.msk [vmem:[#allocation2 + $0x150] sm:$0xff] %vm695, 0.0
        %740 = vst.msk [vmem:[#allocation2 + $0x158] sm:$0xff] %vm695, 0.0
        %741 = vst.msk [vmem:[#allocation2 + $0x160] sm:$0x3] %vm698, 0.0
        %742 = vst.msk [vmem:[#allocation2 + $0x168] sm:$0xff] %vm695, 0.0
        %743 = vst.msk [vmem:[#allocation2 + $0x170] sm:$0xff] %vm695, 0.0
        %744 = vst.msk [vmem:[#allocation2 + $0x178] sm:$0x3] %vm698, 0.0
        %745 = vst.msk [vmem:[#allocation2 + $0x180] sm:$0xff] %vm695, 0.0
        %746 = vst.msk [vmem:[#allocation2 + $0x188] sm:$0xff] %vm695, 0.0
        %747 = vst.msk [vmem:[#allocation2 + $0x190] sm:$0x3] %vm698, 0.0
        %748 = vst.msk [vmem:[#allocation2 + $0x198] sm:$0xff] %vm695, 0.0
        %749 = vst.msk [vmem:[#allocation2 + $0x1a0] sm:$0xff] %vm695, 0.0
        %750 = vst.msk [vmem:[#allocation2 + $0x1a8] sm:$0x3] %vm698, 0.0
        %s751 = scalar_lea.vmem [#allocation2], 24
        %752 = vst.msk [vmem:[%s751 + $0x1] sm:$0xff] %vm695, %v663
        %753 = vst.msk [vmem:[%s751 + $0x9] sm:$0xff] %vm695, %v664
        %s754 = scalar_lea.vmem [#allocation2], 48
        %755 = vst.msk [vmem:[%s754 + $0x1] sm:$0xff] %vm695, %v665
        %756 = vst.msk [vmem:[%s754 + $0x9] sm:$0xff] %vm695, %v666
        %s757 = scalar_lea.vmem [#allocation2], 72
        %758 = vst.msk [vmem:[%s757 + $0x1] sm:$0xff] %vm695, %v667
        %759 = vst.msk [vmem:[%s757 + $0x9] sm:$0xff] %vm695, %v668
        %s760 = scalar_lea.vmem [#allocation2], 96
        %761 = vst.msk [vmem:[%s760 + $0x1] sm:$0xff] %vm695, %v669
        %762 = vst.msk [vmem:[%s760 + $0x9] sm:$0xff] %vm695, %v670
        %s763 = scalar_lea.vmem [#allocation2], 120
        %764 = vst.msk [vmem:[%s763 + $0x1] sm:$0xff] %vm695, %v671
        %765 = vst.msk [vmem:[%s763 + $0x9] sm:$0xff] %vm695, %v672
        %s766 = scalar_lea.vmem [#allocation2], 144
        %767 = vst.msk [vmem:[%s766 + $0x1] sm:$0xff] %vm695, %v673
        %768 = vst.msk [vmem:[%s766 + $0x9] sm:$0xff] %vm695, %v674
        %s769 = scalar_lea.vmem [#allocation2], 168
        %770 = vst.msk [vmem:[%s769 + $0x1] sm:$0xff] %vm695, %v675
        %771 = vst.msk [vmem:[%s769 + $0x9] sm:$0xff] %vm695, %v676
        %s772 = scalar_lea.vmem [#allocation2], 192
        %773 = vst.msk [vmem:[%s772 + $0x1] sm:$0xff] %vm695, %v677
        %774 = vst.msk [vmem:[%s772 + $0x9] sm:$0xff] %vm695, %v678
        %s775 = scalar_lea.vmem [#allocation2], 216
        %776 = vst.msk [vmem:[%s775 + $0x1] sm:$0xff] %vm695, %v679
        %777 = vst.msk [vmem:[%s775 + $0x9] sm:$0xff] %vm695, %v680
        %s778 = scalar_lea.vmem [#allocation2], 240
        %779 = vst.msk [vmem:[%s778 + $0x1] sm:$0xff] %vm695, %v681
        %780 = vst.msk [vmem:[%s778 + $0x9] sm:$0xff] %vm695, %v682
        %s781 = scalar_lea.vmem [#allocation2], 264
        %782 = vst.msk [vmem:[%s781 + $0x1] sm:$0xff] %vm695, %v683
        %783 = vst.msk [vmem:[%s781 + $0x9] sm:$0xff] %vm695, %v684
        %s784 = scalar_lea.vmem [#allocation2], 288
        %785 = vst.msk [vmem:[%s784 + $0x1] sm:$0xff] %vm695, %v685
        %786 = vst.msk [vmem:[%s784 + $0x9] sm:$0xff] %vm695, %v686
        %s787 = scalar_lea.vmem [#allocation2], 312
        %788 = vst.msk [vmem:[%s787 + $0x1] sm:$0xff] %vm695, %v687
        %789 = vst.msk [vmem:[%s787 + $0x9] sm:$0xff] %vm695, %v688
        %s790 = scalar_lea.vmem [#allocation2], 336
        %791 = vst.msk [vmem:[%s790 + $0x1] sm:$0xff] %vm695, %v689
        %792 = vst.msk [vmem:[%s790 + $0x9] sm:$0xff] %vm695, %v690
        %s793 = scalar_lea.vmem [#allocation2], 360
        %794 = vst.msk [vmem:[%s793 + $0x1] sm:$0xff] %vm695, %v691
        %795 = vst.msk [vmem:[%s793 + $0x9] sm:$0xff] %vm695, %v692
        %s796 = scalar_lea.vmem [#allocation2], 384
        %797 = vst.msk [vmem:[%s796 + $0x1] sm:$0xff] %vm695, %v693
        %798 = vst.msk [vmem:[%s796 + $0x9] sm:$0xff] %vm695, %v694
        %v799 = vld [vmem:[#allocation2] ss:$2 sm:$0xff]
        %s800 = scalar_lea.vmem [#allocation2], 48
        %v801 = vld [vmem:[%s800] ss:$2 sm:$0xff]
        %s802 = scalar_lea.vmem [#allocation2], 96
        %v803 = vld [vmem:[%s802] ss:$2 sm:$0xff]
        %s804 = scalar_lea.vmem [#allocation2], 144
        %v805 = vld [vmem:[%s804] ss:$2 sm:$0xff]
        %s806 = scalar_lea.vmem [#allocation2], 192
        %v807 = vld [vmem:[%s806] ss:$2 sm:$0xff]
        %s808 = scalar_lea.vmem [#allocation2], 240
        %v809 = vld [vmem:[%s808] ss:$2 sm:$0xff]
        %s810 = scalar_lea.vmem [#allocation2], 288
        %v811 = vld [vmem:[%s810] ss:$2 sm:$0xff]
        %s812 = scalar_lea.vmem [#allocation2], 336
        %v813 = vld [vmem:[%s812] ss:$2 sm:$0xff]
        %s814 = scalar_lea.vmem [#allocation2], 1
        %v815 = vld [vmem:[%s814] ss:$2 sm:$0xff]
        %s816 = scalar_lea.vmem [#allocation2], 49
        %v817 = vld [vmem:[%s816] ss:$2 sm:$0xff]
        %s818 = scalar_lea.vmem [#allocation2], 97
        %v819 = vld [vmem:[%s818] ss:$2 sm:$0xff]
        %s820 = scalar_lea.vmem [#allocation2], 145
        %v821 = vld [vmem:[%s820] ss:$2 sm:$0xff]
        %s822 = scalar_lea.vmem [#allocation2], 193
        %v823 = vld [vmem:[%s822] ss:$2 sm:$0xff]
        %s824 = scalar_lea.vmem [#allocation2], 241
        %v825 = vld [vmem:[%s824] ss:$2 sm:$0xff]
        %s826 = scalar_lea.vmem [#allocation2], 289
        %v827 = vld [vmem:[%s826] ss:$2 sm:$0xff]
        %s828 = scalar_lea.vmem [#allocation2], 337
        %v829 = vld [vmem:[%s828] ss:$2 sm:$0xff]
        %v830 = vmax.f32 %v799, %v815
        %v831 = vmax.f32 %v801, %v817
        %v832 = vmax.f32 %v803, %v819
        %v833 = vmax.f32 %v805, %v821
        %v834 = vmax.f32 %v807, %v823
        %v835 = vmax.f32 %v809, %v825
        %v836 = vmax.f32 %v811, %v827
        %v837 = vmax.f32 %v813, %v829
        %s838 = scalar_lea.vmem [#allocation2], 2
        %v839 = vld [vmem:[%s838] ss:$2 sm:$0xff]
        %s840 = scalar_lea.vmem [#allocation2], 50
        %v841 = vld [vmem:[%s840] ss:$2 sm:$0xff]
        %s842 = scalar_lea.vmem [#allocation2], 98
        %v843 = vld [vmem:[%s842] ss:$2 sm:$0xff]
        %s844 = scalar_lea.vmem [#allocation2], 146
        %v845 = vld [vmem:[%s844] ss:$2 sm:$0xff]
        %s846 = scalar_lea.vmem [#allocation2], 194
        %v847 = vld [vmem:[%s846] ss:$2 sm:$0xff]
        %s848 = scalar_lea.vmem [#allocation2], 242
        %v849 = vld [vmem:[%s848] ss:$2 sm:$0xff]
        %s850 = scalar_lea.vmem [#allocation2], 290
        %v851 = vld [vmem:[%s850] ss:$2 sm:$0xff]
        %s852 = scalar_lea.vmem [#allocation2], 338
        %v853 = vld [vmem:[%s852] ss:$2 sm:$0xff]
        %v854 = vmax.f32 %v830, %v839
        %v855 = vmax.f32 %v831, %v841
        %v856 = vmax.f32 %v832, %v843
        %v857 = vmax.f32 %v833, %v845
        %v858 = vmax.f32 %v834, %v847
        %v859 = vmax.f32 %v835, %v849
        %v860 = vmax.f32 %v836, %v851
        %v861 = vmax.f32 %v837, %v853
        %v862 = vld [vmem:[%s751] ss:$2 sm:$0xff]
        %s863 = scalar_lea.vmem %s751, 48 [#allocation2]
        %v864 = vld [vmem:[%s863] ss:$2 sm:$0xff]
        %s865 = scalar_lea.vmem %s751, 96 [#allocation2]
        %v866 = vld [vmem:[%s865] ss:$2 sm:$0xff]
        %s867 = scalar_lea.vmem %s751, 144 [#allocation2]
        %v868 = vld [vmem:[%s867] ss:$2 sm:$0xff]
        %s869 = scalar_lea.vmem %s751, 192 [#allocation2]
        %v870 = vld [vmem:[%s869] ss:$2 sm:$0xff]
        %s871 = scalar_lea.vmem %s751, 240 [#allocation2]
        %v872 = vld [vmem:[%s871] ss:$2 sm:$0xff]
        %s873 = scalar_lea.vmem %s751, 288 [#allocation2]
        %v874 = vld [vmem:[%s873] ss:$2 sm:$0xff]
        %s875 = scalar_lea.vmem %s751, 336 [#allocation2]
        %v876 = vld [vmem:[%s875] ss:$2 sm:$0xff]
        %v877 = vmax.f32 %v854, %v862
        %v878 = vmax.f32 %v855, %v864
        %v879 = vmax.f32 %v856, %v866
        %v880 = vmax.f32 %v857, %v868
        %v881 = vmax.f32 %v858, %v870
        %v882 = vmax.f32 %v859, %v872
        %v883 = vmax.f32 %v860, %v874
        %v884 = vmax.f32 %v861, %v876
        %s885 = scalar_lea.vmem %s751, 1 [#allocation2]
        %v886 = vld [vmem:[%s885] ss:$2 sm:$0xff]
        %s887 = scalar_lea.vmem %s751, 49 [#allocation2]
        %v888 = vld [vmem:[%s887] ss:$2 sm:$0xff]
        %s889 = scalar_lea.vmem %s751, 97 [#allocation2]
        %v890 = vld [vmem:[%s889] ss:$2 sm:$0xff]
        %s891 = scalar_lea.vmem %s751, 145 [#allocation2]
        %v892 = vld [vmem:[%s891] ss:$2 sm:$0xff]
        %s893 = scalar_lea.vmem %s751, 193 [#allocation2]
        %v894 = vld [vmem:[%s893] ss:$2 sm:$0xff]
        %s895 = scalar_lea.vmem %s751, 241 [#allocation2]
        %v896 = vld [vmem:[%s895] ss:$2 sm:$0xff]
        %s897 = scalar_lea.vmem %s751, 289 [#allocation2]
        %v898 = vld [vmem:[%s897] ss:$2 sm:$0xff]
        %s899 = scalar_lea.vmem %s751, 337 [#allocation2]
        %v900 = vld [vmem:[%s899] ss:$2 sm:$0xff]
        %v901 = vmax.f32 %v877, %v886
        %v902 = vmax.f32 %v878, %v888
        %v903 = vmax.f32 %v879, %v890
        %v904 = vmax.f32 %v880, %v892
        %v905 = vmax.f32 %v881, %v894
        %v906 = vmax.f32 %v882, %v896
        %v907 = vmax.f32 %v883, %v898
        %v908 = vmax.f32 %v884, %v900
        %s909 = scalar_lea.vmem %s751, 2 [#allocation2]
        %v910 = vld [vmem:[%s909] ss:$2 sm:$0xff]
        %s911 = scalar_lea.vmem %s751, 50 [#allocation2]
        %v912 = vld [vmem:[%s911] ss:$2 sm:$0xff]
        %s913 = scalar_lea.vmem %s751, 98 [#allocation2]
        %v914 = vld [vmem:[%s913] ss:$2 sm:$0xff]
        %s915 = scalar_lea.vmem %s751, 146 [#allocation2]
        %v916 = vld [vmem:[%s915] ss:$2 sm:$0xff]
        %s917 = scalar_lea.vmem %s751, 194 [#allocation2]
        %v918 = vld [vmem:[%s917] ss:$2 sm:$0xff]
        %s919 = scalar_lea.vmem %s751, 242 [#allocation2]
        %v920 = vld [vmem:[%s919] ss:$2 sm:$0xff]
        %s921 = scalar_lea.vmem %s751, 290 [#allocation2]
        %v922 = vld [vmem:[%s921] ss:$2 sm:$0xff]
        %s923 = scalar_lea.vmem %s751, 338 [#allocation2]
        %v924 = vld [vmem:[%s923] ss:$2 sm:$0xff]
        %v925 = vmax.f32 %v901, %v910
        %v926 = vmax.f32 %v902, %v912
        %v927 = vmax.f32 %v903, %v914
        %v928 = vmax.f32 %v904, %v916
        %v929 = vmax.f32 %v905, %v918
        %v930 = vmax.f32 %v906, %v920
        %v931 = vmax.f32 %v907, %v922
        %v932 = vmax.f32 %v908, %v924
        %v933 = vld [vmem:[%s754] ss:$2 sm:$0xff]
        %s934 = scalar_lea.vmem %s754, 48 [#allocation2]
        %v935 = vld [vmem:[%s934] ss:$2 sm:$0xff]
        %s936 = scalar_lea.vmem %s754, 96 [#allocation2]
        %v937 = vld [vmem:[%s936] ss:$2 sm:$0xff]
        %s938 = scalar_lea.vmem %s754, 144 [#allocation2]
        %v939 = vld [vmem:[%s938] ss:$2 sm:$0xff]
        %s940 = scalar_lea.vmem %s754, 192 [#allocation2]
        %v941 = vld [vmem:[%s940] ss:$2 sm:$0xff]
        %s942 = scalar_lea.vmem %s754, 240 [#allocation2]
        %v943 = vld [vmem:[%s942] ss:$2 sm:$0xff]
        %s944 = scalar_lea.vmem %s754, 288 [#allocation2]
        %v945 = vld [vmem:[%s944] ss:$2 sm:$0xff]
        %s946 = scalar_lea.vmem %s754, 336 [#allocation2]
        %v947 = vld [vmem:[%s946] ss:$2 sm:$0xff]
        %v948 = vmax.f32 %v925, %v933
        %v949 = vmax.f32 %v926, %v935
        %v950 = vmax.f32 %v927, %v937
        %v951 = vmax.f32 %v928, %v939
        %v952 = vmax.f32 %v929, %v941
        %v953 = vmax.f32 %v930, %v943
        %v954 = vmax.f32 %v931, %v945
        %v955 = vmax.f32 %v932, %v947
        %s956 = scalar_lea.vmem %s754, 1 [#allocation2]
        %v957 = vld [vmem:[%s956] ss:$2 sm:$0xff]
        %s958 = scalar_lea.vmem %s754, 49 [#allocation2]
        %v959 = vld [vmem:[%s958] ss:$2 sm:$0xff]
        %s960 = scalar_lea.vmem %s754, 97 [#allocation2]
        %v961 = vld [vmem:[%s960] ss:$2 sm:$0xff]
        %s962 = scalar_lea.vmem %s754, 145 [#allocation2]
        %v963 = vld [vmem:[%s962] ss:$2 sm:$0xff]
        %s964 = scalar_lea.vmem %s754, 193 [#allocation2]
        %v965 = vld [vmem:[%s964] ss:$2 sm:$0xff]
        %s966 = scalar_lea.vmem %s754, 241 [#allocation2]
        %v967 = vld [vmem:[%s966] ss:$2 sm:$0xff]
        %s968 = scalar_lea.vmem %s754, 289 [#allocation2]
        %v969 = vld [vmem:[%s968] ss:$2 sm:$0xff]
        %s970 = scalar_lea.vmem %s754, 337 [#allocation2]
        %v971 = vld [vmem:[%s970] ss:$2 sm:$0xff]
        %v972 = vmax.f32 %v948, %v957
        %v973 = vmax.f32 %v949, %v959
        %v974 = vmax.f32 %v950, %v961
        %v975 = vmax.f32 %v951, %v963
        %v976 = vmax.f32 %v952, %v965
        %v977 = vmax.f32 %v953, %v967
        %v978 = vmax.f32 %v954, %v969
        %v979 = vmax.f32 %v955, %v971
        %s980 = scalar_lea.vmem %s754, 2 [#allocation2]
        %v981 = vld [vmem:[%s980] ss:$2 sm:$0xff]
        %s982 = scalar_lea.vmem %s754, 50 [#allocation2]
        %v983 = vld [vmem:[%s982] ss:$2 sm:$0xff]
        %s984 = scalar_lea.vmem %s754, 98 [#allocation2]
        %v985 = vld [vmem:[%s984] ss:$2 sm:$0xff]
        %s986 = scalar_lea.vmem %s754, 146 [#allocation2]
        %v987 = vld [vmem:[%s986] ss:$2 sm:$0xff]
        %s988 = scalar_lea.vmem %s754, 194 [#allocation2]
        %v989 = vld [vmem:[%s988] ss:$2 sm:$0xff]
        %s990 = scalar_lea.vmem %s754, 242 [#allocation2]
        %v991 = vld [vmem:[%s990] ss:$2 sm:$0xff]
        %s992 = scalar_lea.vmem %s754, 290 [#allocation2]
        %v993 = vld [vmem:[%s992] ss:$2 sm:$0xff]
        %s994 = scalar_lea.vmem %s754, 338 [#allocation2]
        %v995 = vld [vmem:[%s994] ss:$2 sm:$0xff]
        %v996 = vmax.f32 %v972, %v981
        %v997 = vmax.f32 %v973, %v983
        %v998 = vmax.f32 %v974, %v985
        %v999 = vmax.f32 %v975, %v987
        %v1000 = vmax.f32 %v976, %v989
        %v1001 = vmax.f32 %v977, %v991
        %v1002 = vmax.f32 %v978, %v993
        %v1003 = vmax.f32 %v979, %v995
        %1004 = vst.msk [vmem:[%s166] sm:$0xff] %vm695, %v996
        %1005 = vst.msk [vmem:[%s166 + $0x8] sm:$0xff] %vm695, %v997
        %1006 = vst.msk [vmem:[%s166 + $0x10] sm:$0xff] %vm695, %v998
        %1007 = vst.msk [vmem:[%s166 + $0x18] sm:$0xff] %vm695, %v999
        %1008 = vst.msk [vmem:[%s166 + $0x20] sm:$0xff] %vm695, %v1000
        %1009 = vst.msk [vmem:[%s166 + $0x28] sm:$0xff] %vm695, %v1001
        %1010 = vst.msk [vmem:[%s166 + $0x30] sm:$0xff] %vm695, %v1002
        %1011 = vst.msk [vmem:[%s166 + $0x38] sm:$0xff] %vm695, %v1003
        %s1012 = sand.u32 %s93, 1
        %s1013 = scalar_lea.sflag [#allocation4], %s1012
        %s1014 = sand.u32 %s93, 1
        %s1015 = smul.addr %s1014, 64
        %s1016 = scalar_lea.vmem [#allocation3], %s1015
        // Predicated region
        $region33: #{client_resnet34x1_forward.1} parent=31 // pred_check
          %p1017 = pneg %p103
        $region34: #{client_resnet34x1_forward.1} parent=31 // pred_check_branch
          %1019 = sbr.rel (%p1017) target = $region36
        $region35: #{client_resnet34x1_forward.1} parent=31 // pred_region
          %s1021 = ssub.s32 1024, 1024
          %1022 = vsyncadd %s1013, %s1021
          %s1023 = smul.addr %s17, 8
          %s1024 = smul.addr %s1023, 128
          %s1025 = scalar_lea.hbm %s3, %s1024
          %s1026 = sshll.u32 %s1016, 4
          %s1027 = int_to_ptr.vmem [resolvable:$true] %s1026
          %1032 = dma.vmem_to_hbm [thread:$0]  %s1027, 1024, %s1025, %s1013, 128, 128, 8
        $region36: #{client_resnet34x1_forward.1} parent=31 // pred_fallthru
          _
      $region32: #{client_resnet34x1_forward.1} parent=5 // pred_fallthru
        _
      %p1033 = scmp.le.s32.totalorder 2, %s12
      // Predicated region
      $region37: #{client_resnet34x1_forward.1} parent=5 // pred_check
        %p1034 = pneg %p1033
      $region38: #{client_resnet34x1_forward.1} parent=5 // pred_check_branch
        %1036 = sbr.rel (%p1034) target = $region40
      $region39: #{client_resnet34x1_forward.1} parent=5 // pred_region
        %s1037 = ssub.s32 %s12, 2
        // Predicated region
        $region41: #{client_resnet34x1_forward.1} parent=39 // pred_check
          %p1038 = pneg %p109
        $region42: #{client_resnet34x1_forward.1} parent=39 // pred_check_branch
          %1040 = sbr.rel (%p1038) target = $region44
        $region43: #{client_resnet34x1_forward.1} parent=39 // pred_region
          %s1041 = sand.u32 %s94, 1
          %s1042 = scalar_lea.sflag [#allocation4], %s1041
          %s1043 = sand.u32 %s94, 1
          %s1044 = smul.addr %s1043, 64
          %s1045 = scalar_lea.vmem [#allocation3], %s1044
          %1046 = dma.done %s1042, 1024
        $region44: #{client_resnet34x1_forward.1} parent=39 // pred_fallthru
          _
      $region40: #{client_resnet34x1_forward.1} parent=5 // pred_fallthru
        _
    $region6: #{client_resnet34x1_forward.1} parent=1 // loop_footer
      %s16 = sadd.s32 1, %s12
    $region7: #{client_resnet34x1_forward.1} parent=1 // loop_footer_branch
      %11 = sbr.rel target = $region3
    $region8: #{client_resnet34x1_forward.1} parent=1 // loop_exit
      _
    %1047 = vsyncpa [#allocation4], 1
    %s1048 = scalar_lea.sflag [#allocation4], 1
    %1049 = vsyncpa %s1048, 1

</llo_original>
